<compile_context>
chip_gen: v6e
topology: v6e:2x2x1
jax: 0.10.0
libtpu: 0.0.40
codegen_flags: <defaults>
</compile_context>

<pallas_src>
import math

import jax
import jax.numpy as jnp
from jax.experimental import pallas as pl
from jax.experimental.pallas import tpu as pltpu


def _attention_kernel(enc_ref, hid_ref, we_ref, wh_ref, out_ref, acc_ref, c_ref):
    """One (batch block, H block) step of folded-v attention scores + softmax.

    enc_ref : (T, bb, Hk)  encoder outputs slice (natural PyTorch layout, H on lanes)
    hid_ref : (bb, 2H)     decoder hidden state for this batch block
    we_ref  : (1, Hk)      folded encoder weights slice  (v @ W[:, 2H:])
    wh_ref  : (1, 2H)      folded hidden weights         (v @ W[:, :2H])
    out_ref : (bb, T)      softmax attention weights (T on lanes)
    acc_ref : (T, bb) f32  partial-score accumulator (VMEM scratch)
    c_ref   : (bb, 1) f32  T-invariant hidden contribution (VMEM scratch)
    """
    k = pl.program_id(1)

    # ---- init (once per batch block): zero accumulator, hidden column -----------
    @pl.when(k == 0)
    def _():
        acc_ref[...] = jnp.zeros_like(acc_ref)
        c_ref[...] = jnp.sum(
            hid_ref[...].astype(jnp.float32) * wh_ref[...].astype(jnp.float32),
            axis=-1, keepdims=True)                                  # (bb, 1)

    # ---- accumulate partial encoder scores for this H slice ---------------------
    enc = enc_ref[...].astype(jnp.float32)                           # (T, bb, Hk)
    we = we_ref[...].astype(jnp.float32)[None, :, :]                 # (1, 1, Hk)
    acc_ref[...] += jnp.sum(enc * we, axis=-1)                       # (T, bb)

    # ---- finalize (once per batch block): transpose + softmax over T ------------
    @pl.when(k == pl.num_programs(1) - 1)
    def _():
        logits = jnp.transpose(acc_ref[...]) + c_ref[...]            # (bb, T)
        m = jnp.max(logits, axis=-1, keepdims=True)
        p = jnp.exp(logits - m)
        out_ref[...] = (p / jnp.sum(p, axis=-1, keepdims=True)).astype(out_ref.dtype)


def _pick_tiles(T, B, H, enc_itemsize):
    """Pick (bb, Hk, vmem_limit_bytes) under a generation-safe VMEM budget."""
    ENC_BUDGET = 24 << 20   # double-buffered encoder-stream target (fits all gens)
    VMEM_LIMIT = 48 << 20   # < 64 MiB (v7x physical), well under v5e/v6e 128 MiB

    # Batch blocks: multiples of 8 dividing B (largest first, all give >=2 grid
    # steps so v7x's two TensorCores both get work); fall back to full B otherwise.
    if B % 8 == 0 and B >= 16:
        bb_cands = sorted({d for d in range(8, B // 2 + 1, 8) if B % d == 0},
                          reverse=True)
        if not bb_cands:
            bb_cands = [8]
    else:
        bb_cands = [B]

    # H-reduction blocks: multiples of 128 dividing H (largest first), else full H.
    if H % 128 == 0:
        hk_cands = sorted({d for d in range(128, H + 1, 128) if H % d == 0},
                          reverse=True)
    else:
        hk_cands = [H]

    def enc_bytes(bb_, hk_):
        return 2 * T * bb_ * hk_ * enc_itemsize      # 2-deep buffered enc tile

    # Prefer the largest batch block; shrink the H block first, then the batch block.
    for bb_try in bb_cands:
        for hk_try in hk_cands:
            if enc_bytes(bb_try, hk_try) <= ENC_BUDGET:
                return bb_try, hk_try, VMEM_LIMIT
    return bb_cands[-1], hk_cands[-1], VMEM_LIMIT


def attention_forward(hidden, encoder_outputs, W, b, v):
    """Pallas implementation of AttentionModule.forward.

    hidden:          (1, B, 2H)
    encoder_outputs: (T, B,  H)
    W: (H, 3H), b: (H,), v: (H,)
    returns: (B, 1, T) attention weights (softmax over T), float32
    """
    T, B, H = encoder_outputs.shape
    assert hidden.shape == (1, B, 2 * H)

    # --- fold v into the Linear weights in f32 (exact algebra; no tanh) -----------
    w_eff = jnp.dot(v.astype(jnp.float32), W.astype(jnp.float32))      # (3H,)
    wh_row = w_eff[: 2 * H].reshape(1, 2 * H)                          # hidden part
    we_row = w_eff[2 * H:].reshape(1, H)                               # encoder part
    del b  # v·b cancels in softmax over T (see header comment)

    # --- stream raw operands in their native dtype (no extra HBM pass) ------------
    enc = encoder_outputs                                              # (T, B, H)
    hid2d = hidden.reshape(B, 2 * H)                                   # (B, 2H), free view

    bb, hk, vmem_limit = _pick_tiles(T, B, H, enc.dtype.itemsize)
    grid = (B // bb, H // hk)                                          # reduction axis last

    grid_spec = pltpu.PrefetchScalarGridSpec(
        num_scalar_prefetch=0,
        grid=grid,
        in_specs=[
            pl.BlockSpec((T, bb, hk), lambda i, k: (0, i, k)),   # encoder slice
            pl.BlockSpec((bb, 2 * H), lambda i, k: (i, 0)),      # hidden block
            pl.BlockSpec((1, hk), lambda i, k: (0, k)),          # folded enc weights slice
            pl.BlockSpec((1, 2 * H), lambda i, k: (0, 0)),       # folded hidden weights
        ],
        out_specs=pl.BlockSpec((bb, T), lambda i, k: (i, 0)),    # scores, T on lanes
        scratch_shapes=[
            pltpu.VMEM((T, bb), jnp.float32),                    # partial scores
            pltpu.VMEM((bb, 1), jnp.float32),                    # hidden contribution
        ],
    )

    scores = pl.pallas_call(
        _attention_kernel,
        out_shape=jax.ShapeDtypeStruct((B, T), jnp.float32),
        grid_spec=grid_spec,
        compiler_params=pltpu.CompilerParams(
            dimension_semantics=("parallel", "arbitrary"),
            vmem_limit_bytes=vmem_limit,
        ),
    )(enc, hid2d, we_row, wh_row)

    # attn_energies.t().unsqueeze(1) -> (B, 1, T)  (free reshape, no transpose)
    return scores[:, None, :]


def attention_reference(hidden, encoder_outputs, W, b, v):
    """Pure-JAX reference mirroring the PyTorch module exactly."""
    T, B, H = encoder_outputs.shape
    hid_rep = jnp.broadcast_to(hidden, (T, B, 2 * H))
    cat = jnp.concatenate([hid_rep, encoder_outputs], axis=2)        # (T, B, 3H)
    energy = jnp.einsum("tbk,hk->tbh", cat, W) + b                   # (T, B, H)
    scores = jnp.einsum("h,tbh->tb", v, energy)                      # (T, B)
    scores = scores.T[:, None, :]                                    # (B, 1, T)
    return jax.nn.softmax(scores, axis=2)


if __name__ == "__main__":
    H = 32   # hidden_size_lstm
    T = 8    # encoder sequence length
    B = 2    # batch size

    key = jax.random.PRNGKey(0)
    k_w, k_b, k_v, k_h, k_e = jax.random.split(key, 5)

    # Deterministic synthetic parameters (same shapes as the PyTorch module):
    #   attn = Linear(3H, H): weight (H, 3H), bias (H,); v: Parameter (H,)
    bound = 1.0 / math.sqrt(3 * H)
    W = jax.random.uniform(k_w, (H, 3 * H), jnp.float32, -bound, bound)
    b = jax.random.uniform(k_b, (H,), jnp.float32, -bound, bound)
    v = jax.random.uniform(k_v, (H,), jnp.float32, 0.0, 1.0)

    hidden = jax.random.normal(k_h, (1, B, 2 * H), jnp.float32)
    encoder_outputs = jax.random.normal(k_e, (T, B, H), jnp.float32)

    out = attention_forward(hidden, encoder_outputs, W, b, v)
    out = jax.block_until_ready(out)

    ref = attention_reference(hidden, encoder_outputs, W, b, v)
    assert out.shape == (B, 1, T), out.shape
    # Note: folding v into W reorders the f32 reduction vs the reference; exact in
    # real arithmetic, drift stays well inside 1e-5 at these sizes.
    assert jnp.allclose(out, ref, atol=1e-5, rtol=1e-5), "mismatch vs reference"

    print("KERNEL_OK")
</pallas_src>

<mosaic_0001>
module attributes {stable_mosaic.version = 11 : i64} {
  func.func @_attention_kernel(%arg0: i32, %arg1: i32, %arg2: memref<8x2x32xf32, #tpu.memory_space<vmem>>, %arg3: memref<2x64xf32, #tpu.memory_space<vmem>>, %arg4: memref<1x32xf32, #tpu.memory_space<vmem>>, %arg5: memref<1x64xf32, #tpu.memory_space<vmem>>, %arg6: memref<2x8xf32, #tpu.memory_space<vmem>>, %arg7: memref<8x2xf32, #tpu.memory_space<vmem>>, %arg8: memref<2x1xf32, #tpu.memory_space<vmem>>) attributes {dimension_semantics = [#tpu.dimension_semantics<parallel>, #tpu.dimension_semantics<arbitrary>], iteration_bounds = array<i64: 1, 1>, scalar_prefetch = 0 : i64, scratch_operands = 2 : i64, tpu.core_type = #tpu.core_type<tc>, window_params = [{transform_indices = @transform_0, window_bounds = array<i64: 8, 2, 32>}, {transform_indices = @transform_1, window_bounds = array<i64: 2, 64>}, {transform_indices = @transform_2, window_bounds = array<i64: 1, 32>}, {pipeline_mode = #tpu.pipeline_mode<synchronous>, transform_indices = @transform_3, window_bounds = array<i64: 1, 64>}, {transform_indices = @transform_4, window_bounds = array<i64: 2, 8>}]} {
    %c0_i32 = arith.constant 0 : i32
    %0 = arith.cmpi eq, %arg1, %c0_i32 : i32
    %1 = arith.extui %0 : i1 to i32
    %c0_i32_0 = arith.constant 0 : i32
    %2 = arith.cmpi ne, %1, %c0_i32_0 : i32
    scf.if %2 {
      %cst_11 = arith.constant 0.000000e+00 : f32
      %15 = vector.broadcast %cst_11 : f32 to vector<8x2xf32>
      %c0_12 = arith.constant 0 : index
      %c0_13 = arith.constant 0 : index
      %16 = vector.load %arg7[%c0_12, %c0_13] : memref<8x2xf32, #tpu.memory_space<vmem>>, vector<8x2xf32>
      tpu.vector_store %arg7[%c0_12, %c0_13], %15 {strides = array<i32>} : memref<8x2xf32, #tpu.memory_space<vmem>>, vector<8x2xf32>,
      %c0_14 = arith.constant 0 : index
      %c0_15 = arith.constant 0 : index
      %17 = vector.load %arg3[%c0_14, %c0_15] : memref<2x64xf32, #tpu.memory_space<vmem>>, vector<2x64xf32>
      %c0_16 = arith.constant 0 : index
      %c0_17 = arith.constant 0 : index
      %18 = vector.load %arg5[%c0_16, %c0_17] : memref<1x64xf32, #tpu.memory_space<vmem>>, vector<1x64xf32>
      %19 = vector.broadcast %18 : vector<1x64xf32> to vector<2x64xf32>
      %20 = arith.mulf %17, %19 : vector<2x64xf32>
      %cst_18 = arith.constant dense<0.000000e+00> : vector<2xf32>
      %21 = vector.multi_reduction <add>, %20, %cst_18 [1] : vector<2x64xf32> to vector<2xf32>
      %22 = vector.shape_cast %21 : vector<2xf32> to vector<2x1xf32>
      %c0_19 = arith.constant 0 : index
      %c0_20 = arith.constant 0 : index
      %23 = vector.load %arg8[%c0_19, %c0_20] : memref<2x1xf32, #tpu.memory_space<vmem>>, vector<2x1xf32>
      tpu.vector_store %arg8[%c0_19, %c0_20], %22 {strides = array<i32>} : memref<2x1xf32, #tpu.memory_space<vmem>>, vector<2x1xf32>,
    } else {
    }
    %c0 = arith.constant 0 : index
    %c0_1 = arith.constant 0 : index
    %c0_2 = arith.constant 0 : index
    %3 = vector.load %arg2[%c0, %c0_1, %c0_2] : memref<8x2x32xf32, #tpu.memory_space<vmem>>, vector<8x2x32xf32>
    %c0_3 = arith.constant 0 : index
    %c0_4 = arith.constant 0 : index
    %4 = vector.load %arg4[%c0_3, %c0_4] : memref<1x32xf32, #tpu.memory_space<vmem>>, vector<1x32xf32>
    %5 = vector.shape_cast %4 : vector<1x32xf32> to vector<1x1x32xf32>
    %c0_5 = arith.constant 0 : index
    %c0_6 = arith.constant 0 : index
    %6 = vector.load %arg7[%c0_5, %c0_6] : memref<8x2xf32, #tpu.memory_space<vmem>>, vector<8x2xf32>
    %7 = vector.broadcast %5 : vector<1x1x32xf32> to vector<8x2x32xf32>
    %8 = arith.mulf %3, %7 : vector<8x2x32xf32>
    %cst = arith.constant dense<0.000000e+00> : vector<8x2xf32>
    %9 = vector.multi_reduction <add>, %8, %cst [2] : vector<8x2x32xf32> to vector<8x2xf32>
    %10 = arith.addf %6, %9 : vector<8x2xf32>
    %c0_7 = arith.constant 0 : index
    %c0_8 = arith.constant 0 : index
    %11 = vector.load %arg7[%c0_7, %c0_8] : memref<8x2xf32, #tpu.memory_space<vmem>>, vector<8x2xf32>
    tpu.vector_store %arg7[%c0_7, %c0_8], %10 {strides = array<i32>} : memref<8x2xf32, #tpu.memory_space<vmem>>, vector<8x2xf32>,
    %c0_i32_9 = arith.constant 0 : i32
    %12 = arith.cmpi eq, %arg1, %c0_i32_9 : i32
    %13 = arith.extui %12 : i1 to i32
    %c0_i32_10 = arith.constant 0 : i32
    %14 = arith.cmpi ne, %13, %c0_i32_10 : i32
    scf.if %14 {
      %c0_11 = arith.constant 0 : index
      %c0_12 = arith.constant 0 : index
      %15 = vector.load %arg7[%c0_11, %c0_12] : memref<8x2xf32, #tpu.memory_space<vmem>>, vector<8x2xf32>
      %16 = tpu.transpose %15, [1, 0] : vector<8x2xf32> -> vector<2x8xf32>
      %c0_13 = arith.constant 0 : index
      %c0_14 = arith.constant 0 : index
      %17 = vector.load %arg8[%c0_13, %c0_14] : memref<2x1xf32, #tpu.memory_space<vmem>>, vector<2x1xf32>
      %18 = vector.broadcast %17 : vector<2x1xf32> to vector<2x8xf32>
      %19 = arith.addf %16, %18 : vector<2x8xf32>
      %cst_15 = arith.constant dense<0xFF800000> : vector<2xf32>
      %20 = vector.multi_reduction <maximumf>, %19, %cst_15 [1] : vector<2x8xf32> to vector<2xf32>
      %21 = vector.shape_cast %20 : vector<2xf32> to vector<2x1xf32>
      %22 = vector.broadcast %21 : vector<2x1xf32> to vector<2x8xf32>
      %23 = arith.subf %19, %22 : vector<2x8xf32>
      %24 = math.exp %23 : vector<2x8xf32>
      %cst_16 = arith.constant dense<0.000000e+00> : vector<2xf32>
      %25 = vector.multi_reduction <add>, %24, %cst_16 [1] : vector<2x8xf32> to vector<2xf32>
      %26 = vector.shape_cast %25 : vector<2xf32> to vector<2x1xf32>
      %27 = vector.broadcast %26 : vector<2x1xf32> to vector<2x8xf32>
      %28 = arith.divf %24, %27 : vector<2x8xf32>
      %c0_17 = arith.constant 0 : index
      %c0_18 = arith.constant 0 : index
      %29 = vector.load %arg6[%c0_17, %c0_18] : memref<2x8xf32, #tpu.memory_space<vmem>>, vector<2x8xf32>
      tpu.vector_store %arg6[%c0_17, %c0_18], %28 {strides = array<i32>} : memref<2x8xf32, #tpu.memory_space<vmem>>, vector<2x8xf32>,
    } else {
    }
    return
  }
  func.func @transform_0(%arg0: i32, %arg1: i32) -> (i32, i32, i32) {
    %c0_i32 = arith.constant 0 : i32
    %c0_i32_0 = arith.constant 0 : i32
    return %c0_i32, %arg0, %arg1 : i32, i32, i32
  }
  func.func @transform_1(%arg0: i32, %arg1: i32) -> (i32, i32) {
    %c0_i32 = arith.constant 0 : i32
    %c0_i32_0 = arith.constant 0 : i32
    return %arg0, %c0_i32 : i32, i32
  }
  func.func @transform_2(%arg0: i32, %arg1: i32) -> (i32, i32) {
    %c0_i32 = arith.constant 0 : i32
    %c0_i32_0 = arith.constant 0 : i32
    return %c0_i32, %arg1 : i32, i32
  }
  func.func @transform_3(%arg0: i32, %arg1: i32) -> (i32, i32) {
    %c0_i32 = arith.constant 0 : i32
    %c0_i32_0 = arith.constant 0 : i32
    %c0_i32_1 = arith.constant 0 : i32
    return %c0_i32, %c0_i32_0 : i32, i32
  }
  func.func @transform_4(%arg0: i32, %arg1: i32) -> (i32, i32) {
    %c0_i32 = arith.constant 0 : i32
    %c0_i32_0 = arith.constant 0 : i32
    return %arg0, %c0_i32 : i32, i32
  }
}

</mosaic_0001>

<llo_original>
// kernel: tpu_custom_call.1
$region0: #{tpu_custom_call.1}
  #allocation0 [shape = 'u32[]', space=smem, size = 0x4, offset = 0x4, fixed_abs, tag = 'smem constant byte address 0x4 - core index']
  #allocation1 [shape = 'u32[144,128]{1,0:T(1,128)}', space=vmem, size = 0x12000, scoped, tag = 'internal scratch']
  #allocation2 [shape = 'f32[8,2]{1,0:T(8,128)}', space=vmem, size = 0x1000, scoped, tag = 'scratch operand']
  #allocation3 [shape = 'f32[2,1]{1,0:T(2,128)}', space=vmem, size = 0x400, scoped, tag = 'scratch operand']
  %s0 = inlined_call_operand.hbm [shape: f32[8,2,32], index: 0, kind: input, shape index: {}]
  %s1 = inlined_call_operand.hbm [shape: f32[2,64], index: 1, kind: input, shape index: {}]
  %s2 = inlined_call_operand.vmem [shape: f32[1,32], index: 2, kind: input, shape index: {}]
  %s3 = inlined_call_operand.vmem [shape: f32[1,64], index: 3, kind: input, shape index: {}]
  %s4 = inlined_call_operand.hbm [shape: f32[2,8], index: 4, kind: output, shape index: {}]
  %s5 = sld [smem:[#allocation0]]
  $region42: #{tpu_custom_call.1} parent=0
    _
  %s7 = ssub.s32 1, %s5
  %s8 = scalar_select 0, %s7, %s5
  $region1: #{tpu_custom_call.1} parent=0
    #allocation4 [shape = 'u8[8192]{0}', space=vmem, size = 0x2000, scoped, tag = 'input window, operand 0, single buffered']
    #allocation5 [shape = 's32[1]{0}', space=sflag, size = 0x4, scoped, tag = 'scoped memory for tpu_custom_call.1']
    #allocation6 [shape = 's32[1]{0}', space=sflag, size = 0x4, scoped, tag = 'scoped memory for tpu_custom_call.1']
    #allocation7 [shape = 'u8[1024]{0}', space=vmem, size = 0x400, scoped, tag = 'input window, operand 1, single buffered']
    #allocation8 [shape = 's32[1]{0}', space=sflag, size = 0x4, scoped, tag = 'scoped memory for tpu_custom_call.1']
    #allocation9 [shape = 'u8[1024]{0}', space=vmem, size = 0x400, scoped, tag = 'output window, operand 0, single buffered']
    %9 = vsyncpa [#allocation5], 0
    %10 = vsyncpa [#allocation8], 0
    %11 = vsyncpa [#allocation6], 0
    // Predicated region
    $region2: #{tpu_custom_call.1} parent=1 // pred_check
      _
    $region3: #{tpu_custom_call.1} parent=1 // pred_check_branch
      %13 = sbr.rel (0) target = $region5
    $region4: #{tpu_custom_call.1} parent=1 // pred_region
      %s15 = ssub.s32 256, 256
      %16 = vsyncadd [#allocation5], %s15
      %s17 = sshll.u32 [#allocation4], 4
      %s18 = int_to_ptr.vmem [resolvable:$true] %s17
      %23 = dma.hbm_to_vmem [thread:$0]  %s0, 256, %s18, [#allocation5], 32, 32, 2
    $region5: #{tpu_custom_call.1} parent=1 // pred_fallthru
      _
    // Predicated region
    $region6: #{tpu_custom_call.1} parent=1 // pred_check
      _
    $region7: #{tpu_custom_call.1} parent=1 // pred_check_branch
      %25 = sbr.rel (0) target = $region9
    $region8: #{tpu_custom_call.1} parent=1 // pred_region
      %s27 = ssub.s32 32, 32
      %28 = vsyncadd [#allocation8], %s27
      %s30 = sshll.u32 [#allocation7], 4
      %s31 = int_to_ptr.vmem [resolvable:$true] %s30
      %33 = dma.hbm_to_vmem [thread:$0]  %s1, 32, %s31, [#allocation8]
    $region9: #{tpu_custom_call.1} parent=1 // pred_fallthru
      _
    // Predicated region
    $region10: #{tpu_custom_call.1} parent=1 // pred_check
      _
    $region11: #{tpu_custom_call.1} parent=1 // pred_check_branch
      %35 = sbr.rel (0) target = $region13
    $region12: #{tpu_custom_call.1} parent=1 // pred_region
      _
    $region13: #{tpu_custom_call.1} parent=1 // pred_fallthru
      _
    // Predicated region
    $region14: #{tpu_custom_call.1} parent=1 // pred_check
      _
    $region15: #{tpu_custom_call.1} parent=1 // pred_check_branch
      %37 = sbr.rel (0) target = $region17
    $region16: #{tpu_custom_call.1} parent=1 // pred_region
      _
    $region17: #{tpu_custom_call.1} parent=1 // pred_fallthru
      _
    // Predicated region
    $region18: #{tpu_custom_call.1} parent=1 // pred_check
      _
    $region19: #{tpu_custom_call.1} parent=1 // pred_check_branch
      %39 = sbr.rel (0) target = $region21
    $region20: #{tpu_custom_call.1} parent=1 // pred_region
      %40 = dma.done [#allocation5], 256
    $region21: #{tpu_custom_call.1} parent=1 // pred_fallthru
      _
    // Predicated region
    $region22: #{tpu_custom_call.1} parent=1 // pred_check
      _
    $region23: #{tpu_custom_call.1} parent=1 // pred_check_branch
      %42 = sbr.rel (0) target = $region25
    $region24: #{tpu_custom_call.1} parent=1 // pred_region
      %43 = dma.done [#allocation8], 32
    $region25: #{tpu_custom_call.1} parent=1 // pred_fallthru
      _
    %p44 = scmp.eq.s32.totalorder 0, 0
    // Predicated region
    $region26: #{tpu_custom_call.1} parent=1 // pred_check
      %p45 = pneg %p44
    $region27: #{tpu_custom_call.1} parent=1 // pred_check_branch
      %47 = sbr.rel (%p45) target = $region29
    $region28: #{tpu_custom_call.1} parent=1 // pred_region
      %vm48 = vcmask 15360
      %49 = vst.msk [vmem:[#allocation2] sm:$0xff] %vm48, 0.0
      %v50 = vld [vmem:[#allocation7] sm:$0x3]
      %v51 = vld [vmem:[%s3] sm:$0x1]
      %v53 = vlaneseq
      %v54 = vshrl.u32 %v53, 7
      %v55 = vsub.s32 0, %v54
      %v56 = vrot.slane %v51, %v55
      %v58 = vmul.f32 %v50, %v56
      %vm59 = vcmask 517120
      %v60 = vsel %vm59, %v58, 0.0
      %61 = vadd.xlane.f32.xlu0 %v60
      %v62 = vpop.xlane.xlu0 %61
      %vm63 = vcmask 1024
      %64 = vst.msk [vmem:[#allocation3] sm:$0x3] %vm63, %v62
    $region29: #{tpu_custom_call.1} parent=1 // pred_fallthru
      _
    %v65 = vld [vmem:[#allocation4] sm:$0x3]
    %v66 = vld [vmem:[#allocation4 + $0x2] sm:$0x3]
    %v67 = vld [vmem:[#allocation4 + $0x4] sm:$0x3]
    %v68 = vld [vmem:[#allocation4 + $0x6] sm:$0x3]
    %v69 = vld [vmem:[#allocation4 + $0x8] sm:$0x3]
    %v70 = vld [vmem:[#allocation4 + $0xa] sm:$0x3]
    %v71 = vld [vmem:[#allocation4 + $0xc] sm:$0x3]
    %v72 = vld [vmem:[#allocation4 + $0xe] sm:$0x3]
    %v73 = vld [vmem:[%s2] sm:$0x1]
    %v74 = vld [vmem:[#allocation2] sm:$0xff]
    %v76 = vlaneseq
    %v77 = vshrl.u32 %v76, 7
    %v78 = vsub.s32 0, %v77
    %v79 = vrot.slane %v73, %v78
    %v81 = vmul.f32 %v65, %v79
    %v82 = vmul.f32 %v66, %v79
    %v83 = vmul.f32 %v67, %v79
    %v84 = vmul.f32 %v68, %v79
    %v85 = vmul.f32 %v69, %v79
    %v86 = vmul.f32 %v70, %v79
    %v87 = vmul.f32 %v71, %v79
    %v88 = vmul.f32 %v72, %v79
    %vm89 = vcmask 254976
    %v90 = vsel %vm89, %v81, 0.0
    %91 = vadd.xlane.f32.xlu0 %v90
    %v92 = vpop.xlane.xlu0 %91
    %v93 = vsel %vm89, %v82, 0.0
    %94 = vadd.xlane.f32.xlu0 %v93
    %v95 = vpop.xlane.xlu0 %94
    %v96 = vsel %vm89, %v83, 0.0
    %97 = vadd.xlane.f32.xlu0 %v96
    %v98 = vpop.xlane.xlu0 %97
    %v99 = vsel %vm89, %v84, 0.0
    %100 = vadd.xlane.f32.xlu0 %v99
    %v101 = vpop.xlane.xlu0 %100
    %v102 = vsel %vm89, %v85, 0.0
    %103 = vadd.xlane.f32.xlu0 %v102
    %v104 = vpop.xlane.xlu0 %103
    %v105 = vsel %vm89, %v86, 0.0
    %106 = vadd.xlane.f32.xlu0 %v105
    %v107 = vpop.xlane.xlu0 %106
    %v108 = vsel %vm89, %v87, 0.0
    %109 = vadd.xlane.f32.xlu0 %v108
    %v110 = vpop.xlane.xlu0 %109
    %v111 = vsel %vm89, %v88, 0.0
    %112 = vadd.xlane.f32.xlu0 %v111
    %v113 = vpop.xlane.xlu0 %112
    %v122 = vlaneseq
    %v123 = vand.u32 %v122, 127
    %v124 = vlaneseq
    %v125 = vshrl.u32 %v124, 7
    %v126 = vsub.s32 %v123, %v125
    %v127 = vrot.slane %v92, %v126
    %v128 = vlaneseq
    %v129 = vshrl.u32 %v128, 7
    %v130 = vsub.s32 %v123, %v129
    %v131 = vrot.slane %v95, %v130
    %v132 = vlaneseq
    %v133 = vshrl.u32 %v132, 7
    %v134 = vsub.s32 %v123, %v133
    %v135 = vrot.slane %v98, %v134
    %v136 = vlaneseq
    %v137 = vshrl.u32 %v136, 7
    %v138 = vsub.s32 %v123, %v137
    %v139 = vrot.slane %v101, %v138
    %v140 = vlaneseq
    %v141 = vshrl.u32 %v140, 7
    %v142 = vsub.s32 %v123, %v141
    %v143 = vrot.slane %v104, %v142
    %v144 = vlaneseq
    %v145 = vshrl.u32 %v144, 7
    %v146 = vsub.s32 %v123, %v145
    %v147 = vrot.slane %v107, %v146
    %v148 = vlaneseq
    %v149 = vshrl.u32 %v148, 7
    %v150 = vsub.s32 %v123, %v149
    %v151 = vrot.slane %v110, %v150
    %v152 = vlaneseq
    %v153 = vshrl.u32 %v152, 7
    %v154 = vsub.s32 %v123, %v153
    %v155 = vrot.slane %v113, %v154
    %vm156 = vcmask 1041409
    %v157 = vsel %vm156, %v131, %v127
    %vm158 = vcmask 1042434
    %v159 = vsel %vm158, %v135, %v157
    %vm160 = vcmask 1043459
    %v161 = vsel %vm160, %v139, %v159
    %vm162 = vcmask 1044484
    %v163 = vsel %vm162, %v143, %v161
    %vm164 = vcmask 1045509
    %v165 = vsel %vm164, %v147, %v163
    %vm166 = vcmask 1046534
    %v167 = vsel %vm166, %v151, %v165
    %vm168 = vcmask 1047559
    %v169 = vsel %vm168, %v155, %v167
    %v171 = vadd.f32 %v74, %v169
    %vm172 = vcmask 15360
    %173 = vst.msk [vmem:[#allocation2] sm:$0xff] %vm172, %v171
    // Predicated region
    $region30: #{tpu_custom_call.1} parent=1 // pred_check
      %p174 = pneg %p44
    $region31: #{tpu_custom_call.1} parent=1 // pred_check_branch
      %176 = sbr.rel (%p174) target = $region33
    $region32: #{tpu_custom_call.1} parent=1 // pred_region
      %v177 = vld [vmem:[#allocation2] sm:$0xff]
      %178 = vxpose.xlu0.b32.start [1/16] %v177, 128
      %179 = vxpose.xlu0.b32.cont [2/16] 0.0, 128
      %180 = vxpose.xlu0.b32.cont [3/16] 0.0, 128
      %181 = vxpose.xlu0.b32.cont [4/16] 0.0, 128
      %182 = vxpose.xlu0.b32.cont [5/16] 0.0, 128
      %183 = vxpose.xlu0.b32.cont [6/16] 0.0, 128
      %184 = vxpose.xlu0.b32.cont [7/16] 0.0, 128
      %185 = vxpose.xlu0.b32.cont [8/16] 0.0, 128
      %186 = vxpose.xlu0.b32.cont [9/16] 0.0, 128
      %187 = vxpose.xlu0.b32.cont [10/16] 0.0, 128
      %188 = vxpose.xlu0.b32.cont [11/16] 0.0, 128
      %189 = vxpose.xlu0.b32.cont [12/16] 0.0, 128
      %190 = vxpose.xlu0.b32.cont [13/16] 0.0, 128
      %191 = vxpose.xlu0.b32.cont [14/16] 0.0, 128
      %192 = vxpose.xlu0.b32.cont [15/16] 0.0, 128
      %193 = vxpose.xlu0.b32.end [16/16] 0.0, 128
      %v194 = vpop.trf.xlu0
      %v195 = vpop.trf.xlu0
      %v196 = vpop.trf.xlu0
      %v197 = vpop.trf.xlu0
      %v198 = vpop.trf.xlu0
      %v199 = vpop.trf.xlu0
      %v200 = vpop.trf.xlu0
      %v201 = vpop.trf.xlu0
      %v202 = vpop.trf.xlu0
      %v203 = vpop.trf.xlu0
      %v204 = vpop.trf.xlu0
      %v205 = vpop.trf.xlu0
      %v206 = vpop.trf.xlu0
      %v207 = vpop.trf.xlu0
      %v208 = vpop.trf.xlu0
      %v209 = vpop.trf.xlu0
      %v210 = vld [vmem:[#allocation3] sm:$0x3]
      %212 = vset.pattern.permute.xlu0 0
      %213 = vperm.xlu0 %212, %v210
      %v214 = vpop.permute.xlu0 %213
      %v216 = vadd.f32 %v194, %v214
      %vm217 = vcmask 58368
      %v218 = vsel %vm217, %v216, -inf
      %219 = vmax.xlane.f32.xlu0 %v218
      %v220 = vpop.xlane.xlu0 %219
      %v221 = vsub.f32 %v216, %v220
      %v222 = vmul.f32 %v221, 1.442695
      %v223 = vpow.pop %v222
      %v224 = vsel %vm217, %v223, 0.0
      %225 = vadd.xlane.f32.xlu0 %v224
      %v226 = vpop.xlane.xlu0 %225
      %v227 = vrcp.pop %v226
      %v228 = vmul.f32 %v223, %v227
      %229 = vst.msk [vmem:[#allocation9] sm:$0x3] %vm217, %v228
    $region33: #{tpu_custom_call.1} parent=1 // pred_fallthru
      _
    // Predicated region
    $region34: #{tpu_custom_call.1} parent=1 // pred_check
      _
    $region35: #{tpu_custom_call.1} parent=1 // pred_check_branch
      %231 = sbr.rel (0) target = $region37
    $region36: #{tpu_custom_call.1} parent=1 // pred_region
      %s233 = ssub.s32 32, 32
      %234 = vsyncadd [#allocation6], %s233
      %s236 = sshll.u32 [#allocation9], 4
      %s237 = int_to_ptr.vmem [resolvable:$true] %s236
      %239 = dma.vmem_to_hbm [thread:$0]  %s237, 32, %s4, [#allocation6]
    $region37: #{tpu_custom_call.1} parent=1 // pred_fallthru
      _
    // Predicated region
    $region38: #{tpu_custom_call.1} parent=1 // pred_check
      _
    $region39: #{tpu_custom_call.1} parent=1 // pred_check_branch
      %241 = sbr.rel (0) target = $region41
    $region40: #{tpu_custom_call.1} parent=1 // pred_region
      %242 = dma.done [#allocation6], 32
    $region41: #{tpu_custom_call.1} parent=1 // pred_fallthru
      _
    %243 = vsyncpa [#allocation5], 1
    %244 = vsyncpa [#allocation8], 1
    %245 = vsyncpa [#allocation6], 1

</llo_original>
